<compile_context>
chip_gen: v7x
topology: tpu7x:2x2x1
jax: 0.10.0
libtpu: 0.0.40
codegen_flags: <defaults>
</compile_context>

<pallas_src>
import jax
import jax.numpy as jnp
from jax.experimental import pallas as pl
from jax.experimental.pallas import tpu as pltpu

# ----- logical (PyTorch module) sizes -----
N_NODES = 34          # karate-club-sized graph (matches the 34-dim one-hot features)
IN_FEATS = 34
HIDDEN = 16
OUT_FEATS = 2

# ----- TPU-friendly padded sizes -----
N_PAD = 128           # node dim padded to 128 (lane-dense, sublane-aligned)
F_PAD = 128           # shared padded feature width for IN / HIDDEN / OUT
M_OUT = 48            # output node rows kept in layer 2 (>= 34, multiple of 16)

# ----- layout of the single packed (128, 128) f32 parameter block -----
#   W1: rows [0, 34)   x lanes [64, 80)    (input feats -> hidden units)
#   W2: rows [64, 80)  x lanes [0, 2)      (hidden units -> output feats)
#   b1: row 96,  lanes [64, 80)
#   b2: row 104, lanes [0, 2)
# Invariants that make sharing one block safe:
#   * adjacency / features are zero outside [0, 34)  => agg1 lanes >= 34 are 0,
#   * b1 is zero outside lanes [64, 80)              => h1 / agg2 are nonzero only
#     on lanes [64, 80),
# so in each matmul the "other" weight's rows are multiplied by exact zeros.
_H_LANE = 64
_B1_ROW = 96
_B2_ROW = 104


def gcn_net_kernel(ax_ref, p_ref, out_ref):
    """Whole 2-layer GCN forward on padded, VMEM-resident slabs.

    ax_ref : (2*N_PAD, F_PAD) bf16 — rows [0,128)   = adjacency A (A[v,u]=1 iff u->v),
                                     rows [128,256) = one-hot node features X.
                                     Both are 0/1, so the bf16 cast is exact.
    p_ref  : (F_PAD, F_PAD) f32    — combined W1/W2/b1/b2 block (layout above).
    out_ref: (M_OUT, F_PAD) f32    — padded logits; valid region is [:34, :2].
    """
    a_bf16 = ax_ref[0:N_PAD, :]                          # (128, 128) bf16
    x_bf16 = ax_ref[N_PAD:2 * N_PAD, :]                  # (128, 128) bf16
    w = p_ref[...]                                       # (128, 128) f32
    b1 = p_ref[_B1_ROW:_B1_ROW + 1, :]                   # (1, 128)  f32
    b2 = p_ref[_B2_ROW:_B2_ROW + 1, :]                   # (1, 128)  f32

    # ---- layer 1: sum-aggregate over in-neighbors, Linear, ReLU ----
    # A and X are 0/1 -> bf16 MXU pass with f32 accumulation is exact.
    agg1 = jnp.dot(a_bf16, x_bf16, preferred_element_type=jnp.float32)     # (128, 128)
    h1 = jnp.maximum(
        jnp.dot(agg1, w, preferred_element_type=jnp.float32) + b1, 0.0)    # (128, 128)

    # ---- layer 2: aggregate (f32; h1 is not exactly bf16-representable), Linear ----
    # Only the first 48 node rows are needed; the exact 0/1 cast is folded into the
    # dot argument so no full-size f32 copy of A stays live.
    agg2 = jnp.dot(ax_ref[0:M_OUT, :].astype(jnp.float32), h1,
                   preferred_element_type=jnp.float32)                     # (48, 128)
    out_ref[...] = jnp.dot(agg2, w, preferred_element_type=jnp.float32) + b2


# ----- one-time packing (per graph / per model), NOT in the per-call path -----
def pack_graph_slab(adj, features):
    """bf16 slab: adjacency stacked over features — one lane-dense DMA per call."""
    ax = jnp.zeros((2 * N_PAD, F_PAD), jnp.bfloat16)
    ax = ax.at[:N_NODES, :N_NODES].set(adj.astype(jnp.bfloat16))
    ax = ax.at[N_PAD:N_PAD + N_NODES, :IN_FEATS].set(features.astype(jnp.bfloat16))
    return ax


def pack_param_slab(w1, b1, w2, b2):
    """Single (128, 128) f32 block holding W1, W2, b1, b2 (layout documented above)."""
    p = jnp.zeros((F_PAD, F_PAD), jnp.float32)
    p = p.at[:IN_FEATS, _H_LANE:_H_LANE + HIDDEN].set(w1)
    p = p.at[_H_LANE:_H_LANE + HIDDEN, :OUT_FEATS].set(w2)
    p = p.at[_B1_ROW, _H_LANE:_H_LANE + HIDDEN].set(b1.reshape(-1))
    p = p.at[_B2_ROW, :OUT_FEATS].set(b2.reshape(-1))
    return p


@jax.jit
def gcn_net_forward(ax_slab, p_slab):
    """Run the kernel once on pre-packed slabs; slice the logical (34, 2) result."""
    vmem = pl.BlockSpec(memory_space=pltpu.VMEM)
    # two full 128^3 matmuls (layer 1) + two 48x128x128 matmuls (layer 2)
    flops = 2 * (2 * N_PAD * F_PAD * F_PAD + 2 * M_OUT * F_PAD * F_PAD)
    bytes_accessed = (2 * N_PAD * F_PAD) * 2 + (F_PAD * F_PAD) * 4 + (M_OUT * F_PAD) * 4

    out_pad = pl.pallas_call(
        gcn_net_kernel,
        out_shape=jax.ShapeDtypeStruct((M_OUT, F_PAD), jnp.float32),
        in_specs=[vmem, vmem],
        out_specs=vmem,
        cost_estimate=pl.CostEstimate(
            flops=flops, transcendentals=0, bytes_accessed=bytes_accessed),
    )(ax_slab, p_slab)

    # Zero padding is mathematically inert for sum aggregation; slice the logical result.
    # (Padded rows >= 34 contain broadcast b2, not zeros — never reuse them as zeros.)
    return out_pad[:N_NODES, :OUT_FEATS]


def init_params(key):
    """Deterministic init mimicking nn.Linear default (uniform +/- 1/sqrt(fan_in))."""
    k1, k2, k3, k4 = jax.random.split(key, 4)
    bound1 = 1.0 / jnp.sqrt(jnp.float32(IN_FEATS))
    bound2 = 1.0 / jnp.sqrt(jnp.float32(HIDDEN))
    # stored pre-transposed: (in, out) so the kernel computes H @ W + b
    w1 = jax.random.uniform(k1, (IN_FEATS, HIDDEN), jnp.float32, -bound1, bound1)
    b1 = jax.random.uniform(k2, (1, HIDDEN), jnp.float32, -bound1, bound1)
    w2 = jax.random.uniform(k3, (HIDDEN, OUT_FEATS), jnp.float32, -bound2, bound2)
    b2 = jax.random.uniform(k4, (1, OUT_FEATS), jnp.float32, -bound2, bound2)
    return w1, b1, w2, b2


def make_graph_and_features(key):
    """Deterministic random directed graph (dense adjacency) + one-hot node features."""
    adj = (jax.random.uniform(key, (N_NODES, N_NODES)) < 0.2).astype(jnp.float32)
    features = jnp.eye(N_NODES, IN_FEATS, dtype=jnp.float32)   # one-hot features
    return adj, features


def reference_forward(adj, features, w1, b1, w2, b2):
    """Plain-JAX f32 reference of the same math (for a sanity check)."""
    h = jnp.maximum(adj @ features @ w1 + b1, 0.0)
    return adj @ h @ w2 + b2


if __name__ == "__main__":
    key = jax.random.PRNGKey(0)
    k_graph, k_params = jax.random.split(key)

    adj, features = make_graph_and_features(k_graph)
    w1, b1, w2, b2 = init_params(k_params)

    # Pack once per graph / once per model (hoisted out of the per-call path).
    ax_slab = jax.block_until_ready(pack_graph_slab(adj, features))
    p_slab = jax.block_until_ready(pack_param_slab(w1, b1, w2, b2))

    out = gcn_net_forward(ax_slab, p_slab)
    out = jax.block_until_ready(out)

    ref = reference_forward(adj, features, w1, b1, w2, b2)
    assert out.shape == (N_NODES, OUT_FEATS)
    assert jnp.allclose(out, ref, atol=1e-4, rtol=1e-4)

    print("KERNEL_OK")
</pallas_src>

<mosaic_0001>
module attributes {stable_mosaic.version = 11 : i64} {
  func.func @gcn_net_kernel(%arg0: memref<256x128xbf16, #tpu.memory_space<vmem>>, %arg1: memref<128x128xf32, #tpu.memory_space<vmem>>, %arg2: memref<48x128xf32, #tpu.memory_space<vmem>>) attributes {dimension_semantics = [], scalar_prefetch = 0 : i64, scratch_operands = 0 : i64, tpu.core_type = #tpu.core_type<tc>} {
    %c0 = arith.constant 0 : index
    %c0_0 = arith.constant 0 : index
    %0 = vector.load %arg0[%c0, %c0_0] : memref<256x128xbf16, #tpu.memory_space<vmem>>, vector<128x128xbf16>
    %c128 = arith.constant 128 : index
    %c0_1 = arith.constant 0 : index
    %1 = vector.load %arg0[%c128, %c0_1] : memref<256x128xbf16, #tpu.memory_space<vmem>>, vector<128x128xbf16>
    %c0_2 = arith.constant 0 : index
    %c0_3 = arith.constant 0 : index
    %2 = vector.load %arg1[%c0_2, %c0_3] : memref<128x128xf32, #tpu.memory_space<vmem>>, vector<128x128xf32>
    %c96 = arith.constant 96 : index
    %c0_4 = arith.constant 0 : index
    %3 = vector.load %arg1[%c96, %c0_4] : memref<128x128xf32, #tpu.memory_space<vmem>>, vector<1x128xf32>
    %c104 = arith.constant 104 : index
    %c0_5 = arith.constant 0 : index
    %4 = vector.load %arg1[%c104, %c0_5] : memref<128x128xf32, #tpu.memory_space<vmem>>, vector<1x128xf32>
    %cst = arith.constant dense<0.000000e+00> : vector<128x128xf32>
    %5 = tpu.matmul %0, %1, %cst {dimension_numbers = #tpu.dot_dimension_numbers<[1], [0], [0], [1], [0, 0, 1, 1], [], []>} : vector<128x128xbf16>, vector<128x128xbf16>, vector<128x128xf32> -> vector<128x128xf32>
    %cst_6 = arith.constant dense<0.000000e+00> : vector<128x128xf32>
    %6 = tpu.matmul %5, %2, %cst_6 {dimension_numbers = #tpu.dot_dimension_numbers<[1], [0], [0], [1], [0, 0, 1, 1], [], []>} : vector<128x128xf32>, vector<128x128xf32>, vector<128x128xf32> -> vector<128x128xf32>
    %7 = vector.broadcast %3 : vector<1x128xf32> to vector<128x128xf32>
    %8 = arith.addf %6, %7 : vector<128x128xf32>
    %cst_7 = arith.constant 0.000000e+00 : f32
    %9 = vector.broadcast %cst_7 : f32 to vector<128x128xf32>
    %10 = arith.maximumf %8, %9 : vector<128x128xf32>
    %c0_8 = arith.constant 0 : index
    %c0_9 = arith.constant 0 : index
    %11 = vector.load %arg0[%c0_8, %c0_9] : memref<256x128xbf16, #tpu.memory_space<vmem>>, vector<48x128xbf16>
    %12 = arith.extf %11 : vector<48x128xbf16> to vector<48x128xf32>
    %cst_10 = arith.constant dense<0.000000e+00> : vector<48x128xf32>
    %13 = tpu.matmul %12, %10, %cst_10 {dimension_numbers = #tpu.dot_dimension_numbers<[1], [0], [0], [1], [0, 0, 1, 1], [], []>} : vector<48x128xf32>, vector<128x128xf32>, vector<48x128xf32> -> vector<48x128xf32>
    %cst_11 = arith.constant dense<0.000000e+00> : vector<48x128xf32>
    %14 = tpu.matmul %13, %2, %cst_11 {dimension_numbers = #tpu.dot_dimension_numbers<[1], [0], [0], [1], [0, 0, 1, 1], [], []>} : vector<48x128xf32>, vector<128x128xf32>, vector<48x128xf32> -> vector<48x128xf32>
    %15 = vector.broadcast %4 : vector<1x128xf32> to vector<48x128xf32>
    %16 = arith.addf %14, %15 : vector<48x128xf32>
    %c0_12 = arith.constant 0 : index
    %c0_13 = arith.constant 0 : index
    %17 = vector.load %arg2[%c0_12, %c0_13] : memref<48x128xf32, #tpu.memory_space<vmem>>, vector<48x128xf32>
    tpu.vector_store %arg2[%c0_12, %c0_13], %16 {strides = array<i32>} : memref<48x128xf32, #tpu.memory_space<vmem>>, vector<48x128xf32>,
    return
  }
}

</mosaic_0001>

<llo_original>
// kernel: gcn_net_forward.1
$region0: #{gcn_net_forward.1}
  #allocation0 [shape = 'u32[]', space=smem, size = 0x4, offset = 0x4, fixed_abs, tag = 'smem constant byte address 0x4 - core index']
  #allocation1 [shape = 'u32[144,128]{1,0:T(1,128)}', space=vmem, size = 0x12000, scoped, tag = 'internal scratch']
  %s0 = inlined_call_operand.hbm [shape: bf16[256,128], index: 0, kind: input, shape index: {}]
  %s1 = inlined_call_operand.hbm [shape: f32[128,128], index: 1, kind: input, shape index: {}]
  %s2 = inlined_call_operand.vmem [shape: f32[48,128], index: 2, kind: output, shape index: {}]
  %s3 = sld [smem:[#allocation0]]
  $region26: #{gcn_net_forward.1} parent=0
    _
  %s5 = ssub.s32 1, %s3
  %s6 = scalar_select 0, %s5, %s3
  $region1: #{gcn_net_forward.1} parent=0
    #allocation2 [shape = 'u8[65536]{0}', space=vmem, size = 0x10000, scoped, tag = 'input window, operand 0, single buffered']
    #allocation3 [shape = 's32[1]{0}', space=sflag, size = 0x4, scoped, tag = 'scoped memory for gcn_net_forward.1']
    #allocation4 [shape = 'u8[65536]{0}', space=vmem, size = 0x10000, scoped, tag = 'input window, operand 1, single buffered']
    #allocation5 [shape = 's32[1]{0}', space=sflag, size = 0x4, scoped, tag = 'scoped memory for gcn_net_forward.1']
    %7 = vsyncpa [#allocation3], 0
    %8 = vsyncpa [#allocation5], 0
    // Predicated region
    $region2: #{gcn_net_forward.1} parent=1 // pred_check
      _
    $region3: #{gcn_net_forward.1} parent=1 // pred_check_branch
      %10 = sbr.rel (0) target = $region5
    $region4: #{gcn_net_forward.1} parent=1 // pred_region
      %s12 = ssub.s32 2048, 2048
      %13 = vsyncadd [#allocation3], %s12
      %s14 = sshll.u32 [#allocation2], 4
      %s15 = int_to_ptr.vmem [resolvable:$true] %s14
      %20 = dma.hbm_to_vmem [thread:$0]  %s0, 2048, %s15, [#allocation3], 64, 64, 4
    $region5: #{gcn_net_forward.1} parent=1 // pred_fallthru
      _
    // Predicated region
    $region6: #{gcn_net_forward.1} parent=1 // pred_check
      _
    $region7: #{gcn_net_forward.1} parent=1 // pred_check_branch
      %22 = sbr.rel (0) target = $region9
    $region8: #{gcn_net_forward.1} parent=1 // pred_region
      %s24 = ssub.s32 2048, 2048
      %25 = vsyncadd [#allocation5], %s24
      %s26 = sshll.u32 [#allocation4], 4
      %s27 = int_to_ptr.vmem [resolvable:$true] %s26
      %32 = dma.hbm_to_vmem [thread:$0]  %s1, 2048, %s27, [#allocation5], 128, 128, 8
    $region9: #{gcn_net_forward.1} parent=1 // pred_fallthru
      _
    // Predicated region
    $region10: #{gcn_net_forward.1} parent=1 // pred_check
      _
    $region11: #{gcn_net_forward.1} parent=1 // pred_check_branch
      %34 = sbr.rel (0) target = $region13
    $region12: #{gcn_net_forward.1} parent=1 // pred_region
      %35 = dma.done [#allocation3], 2048
    $region13: #{gcn_net_forward.1} parent=1 // pred_fallthru
      _
    // Predicated region
    $region14: #{gcn_net_forward.1} parent=1 // pred_check
      _
    $region15: #{gcn_net_forward.1} parent=1 // pred_check_branch
      %37 = sbr.rel (0) target = $region17
    $region16: #{gcn_net_forward.1} parent=1 // pred_region
      %38 = dma.done [#allocation5], 2048
    $region17: #{gcn_net_forward.1} parent=1 // pred_fallthru
      _
    %v40 = vld [vmem:[#allocation2] sm:$0xf]
    %v41 = vld [vmem:[#allocation2 + $0x4] sm:$0xf]
    %v42 = vld [vmem:[#allocation2 + $0x8] sm:$0xf]
    %v43 = vld [vmem:[#allocation2 + $0xc] sm:$0xf]
    %v44 = vld [vmem:[#allocation2 + $0x10] sm:$0xf]
    %v45 = vld [vmem:[#allocation2 + $0x14] sm:$0xf]
    %v46 = vld [vmem:[#allocation2 + $0x18] sm:$0xf]
    %v47 = vld [vmem:[#allocation2 + $0x1c] sm:$0xf]
    %v48 = vld [vmem:[#allocation2 + $0x20] sm:$0xf]
    %v49 = vld [vmem:[#allocation2 + $0x24] sm:$0xf]
    %v50 = vld [vmem:[#allocation2 + $0x28] sm:$0xf]
    %v51 = vld [vmem:[#allocation2 + $0x2c] sm:$0xf]
    %v52 = vld [vmem:[#allocation2 + $0x30] sm:$0xf]
    %v53 = vld [vmem:[#allocation2 + $0x34] sm:$0xf]
    %v54 = vld [vmem:[#allocation2 + $0x38] sm:$0xf]
    %v55 = vld [vmem:[#allocation2 + $0x3c] sm:$0xf]
    %v56 = vld [vmem:[#allocation2 + $0x40] sm:$0xf]
    %v57 = vld [vmem:[#allocation2 + $0x44] sm:$0xf]
    %v58 = vld [vmem:[#allocation2 + $0x48] sm:$0xf]
    %v59 = vld [vmem:[#allocation2 + $0x4c] sm:$0xf]
    %v60 = vld [vmem:[#allocation2 + $0x50] sm:$0xf]
    %v61 = vld [vmem:[#allocation2 + $0x54] sm:$0xf]
    %v62 = vld [vmem:[#allocation2 + $0x58] sm:$0xf]
    %v63 = vld [vmem:[#allocation2 + $0x5c] sm:$0xf]
    %v64 = vld [vmem:[#allocation2 + $0x60] sm:$0xf]
    %v65 = vld [vmem:[#allocation2 + $0x64] sm:$0xf]
    %v66 = vld [vmem:[#allocation2 + $0x68] sm:$0xf]
    %v67 = vld [vmem:[#allocation2 + $0x6c] sm:$0xf]
    %v68 = vld [vmem:[#allocation2 + $0x70] sm:$0xf]
    %v69 = vld [vmem:[#allocation2 + $0x74] sm:$0xf]
    %v70 = vld [vmem:[#allocation2 + $0x78] sm:$0xf]
    %v71 = vld [vmem:[#allocation2 + $0x7c] sm:$0xf]
    %v72 = vld [vmem:[#allocation4] sm:$0xff]
    %v73 = vld [vmem:[#allocation4 + $0x8] sm:$0xff]
    %v74 = vld [vmem:[#allocation4 + $0x10] sm:$0xff]
    %v75 = vld [vmem:[#allocation4 + $0x18] sm:$0xff]
    %v76 = vld [vmem:[#allocation4 + $0x20] sm:$0xff]
    %v77 = vld [vmem:[#allocation4 + $0x28] sm:$0xff]
    %v78 = vld [vmem:[#allocation4 + $0x30] sm:$0xff]
    %v79 = vld [vmem:[#allocation4 + $0x38] sm:$0xff]
    %v80 = vld [vmem:[#allocation4 + $0x40] sm:$0xff]
    %v81 = vld [vmem:[#allocation4 + $0x48] sm:$0xff]
    %v82 = vld [vmem:[#allocation4 + $0x50] sm:$0xff]
    %v83 = vld [vmem:[#allocation4 + $0x58] sm:$0xff]
    %v84 = vld [vmem:[#allocation4 + $0x60] sm:$0xff]
    %v85 = vld [vmem:[#allocation4 + $0x68] sm:$0xff]
    %v86 = vld [vmem:[#allocation4 + $0x70] sm:$0xff]
    %v87 = vld [vmem:[#allocation4 + $0x78] sm:$0xff]
    %v88 = vld [vmem:[#allocation4 + $0x60] sm:$0x1]
    %v89 = vld [vmem:[#allocation4 + $0x68] sm:$0x1]
    %v106 = vunpack.c.l.b16 %v40
    %v107 = vunpack.c.l.b16 %v41
    %v108 = vunpack.c.l.b16 %v42
    %v109 = vunpack.c.l.b16 %v43
    %v110 = vunpack.c.l.b16 %v44
    %v111 = vunpack.c.l.b16 %v45
    %v112 = vunpack.c.l.b16 %v46
    %v113 = vunpack.c.l.b16 %v47
    %v114 = vunpack.c.l.b16 %v48
    %v115 = vunpack.c.l.b16 %v49
    %v116 = vunpack.c.l.b16 %v50
    %v117 = vunpack.c.l.b16 %v51
    %v118 = vunpack.c.l.b16 %v52
    %v119 = vunpack.c.l.b16 %v53
    %v120 = vunpack.c.l.b16 %v54
    %v121 = vunpack.c.l.b16 %v55
    %v122 = vpack.c.b16 %v107, %v106
    %v123 = vpack.c.b16 %v109, %v108
    %v124 = vpack.c.b16 %v111, %v110
    %v125 = vpack.c.b16 %v113, %v112
    %v126 = vpack.c.b16 %v115, %v114
    %v127 = vpack.c.b16 %v117, %v116
    %v128 = vpack.c.b16 %v119, %v118
    %v129 = vpack.c.b16 %v121, %v120
    %v154 = vunpack.c.l.b16 %v56
    %v155 = vunpack.c.l.b16 %v57
    %v156 = vunpack.c.l.b16 %v58
    %v157 = vunpack.c.l.b16 %v59
    %v158 = vunpack.c.l.b16 %v60
    %v159 = vunpack.c.l.b16 %v61
    %v160 = vunpack.c.l.b16 %v62
    %v161 = vunpack.c.l.b16 %v63
    %v162 = vunpack.c.l.b16 %v64
    %v163 = vunpack.c.l.b16 %v65
    %v164 = vunpack.c.l.b16 %v66
    %v165 = vunpack.c.l.b16 %v67
    %v166 = vunpack.c.l.b16 %v68
    %v167 = vunpack.c.l.b16 %v69
    %v168 = vunpack.c.l.b16 %v70
    %v169 = vunpack.c.l.b16 %v71
    %v170 = vpack.c.b16 %v155, %v154
    %v171 = vpack.c.b16 %v157, %v156
    %v172 = vpack.c.b16 %v159, %v158
    %v173 = vpack.c.b16 %v161, %v160
    %v174 = vpack.c.b16 %v163, %v162
    %v175 = vpack.c.b16 %v165, %v164
    %v176 = vpack.c.b16 %v167, %v166
    %v177 = vpack.c.b16 %v169, %v168
    %186 = vmatprep.subr.bf16.mxu0 0
    %187 = vmatpush1.bf16.msra.mxu0 %v170
    %188 = vmatprep.subr.bf16.mxu0 0
    %189 = vmatpush1.bf16.msra.mxu0 %v171
    %190 = vmatprep.subr.bf16.mxu0 0
    %191 = vmatpush1.bf16.msra.mxu0 %v172
    %192 = vmatprep.subr.bf16.mxu0 0
    %193 = vmatpush1.bf16.msra.mxu0 %v173
    %194 = vmatprep.subr.bf16.mxu0 0
    %195 = vmatpush1.bf16.msra.mxu0 %v174
    %196 = vmatprep.subr.bf16.mxu0 0
    %197 = vmatpush1.bf16.msra.mxu0 %v175
    %198 = vmatprep.subr.bf16.mxu0 0
    %199 = vmatpush1.bf16.msra.mxu0 %v176
    %200 = vmatprep.subr.bf16.mxu0 0
    %201 = vmatpush1.bf16.msra.mxu0 %v177
    %202 = vmatprep.subr.bf16.mxu0 0
    %203 = vmatpush1.bf16.msra.mxu0 0
    %204 = vmatprep.subr.bf16.mxu0 0
    %205 = vmatpush1.bf16.msra.mxu0 0
    %206 = vmatprep.subr.bf16.mxu0 0
    %207 = vmatpush1.bf16.msra.mxu0 0
    %208 = vmatprep.subr.bf16.mxu0 0
    %209 = vmatpush1.bf16.msra.mxu0 0
    %210 = vmatprep.subr.bf16.mxu0 0
    %211 = vmatpush1.bf16.msra.mxu0 0
    %212 = vmatprep.subr.bf16.mxu0 0
    %213 = vmatpush1.bf16.msra.mxu0 0
    %214 = vmatprep.subr.bf16.mxu0 0
    %215 = vmatpush1.bf16.msra.mxu0 0
    %216 = vmatprep.subr.bf16.mxu0 0
    %217 = vmatpush1.bf16.msra.mxu0 0
    %218 = vmatprep.mubr.bf16.mxu0 0
    %219 = vmatmul.mubr.bf16.gmra.mrb[0].mxu0 %v122
    %v220 = vpop.f32.mrb[0].mxu0
    %v221 = vadd.f32 0.0, %v220
    %v222 = vpop.f32.mrb[0].mxu0
    %v223 = vpop.f32.mrb[0].mxu0
    %v224 = vadd.f32 0.0, %v223
    %v225 = vpop.f32.mrb[0].mxu0
    %226 = vmatprep.mubr.bf16.mxu0 0
    %227 = vmatmul.mubr.bf16.gmra.mrb[0].mxu0 %v123
    %v228 = vpop.f32.mrb[0].mxu0
    %v229 = vadd.f32 0.0, %v228
    %v230 = vpop.f32.mrb[0].mxu0
    %v231 = vpop.f32.mrb[0].mxu0
    %v232 = vadd.f32 0.0, %v231
    %v233 = vpop.f32.mrb[0].mxu0
    %234 = vmatprep.mubr.bf16.mxu0 0
    %235 = vmatmul.mubr.bf16.gmra.mrb[0].mxu0 %v124
    %v236 = vpop.f32.mrb[0].mxu0
    %v237 = vadd.f32 0.0, %v236
    %v238 = vpop.f32.mrb[0].mxu0
    %v239 = vpop.f32.mrb[0].mxu0
    %v240 = vadd.f32 0.0, %v239
    %v241 = vpop.f32.mrb[0].mxu0
    %242 = vmatprep.mubr.bf16.mxu0 0
    %243 = vmatmul.mubr.bf16.gmra.mrb[0].mxu0 %v125
    %v244 = vpop.f32.mrb[0].mxu0
    %v245 = vadd.f32 0.0, %v244
    %v246 = vpop.f32.mrb[0].mxu0
    %v247 = vpop.f32.mrb[0].mxu0
    %v248 = vadd.f32 0.0, %v247
    %v249 = vpop.f32.mrb[0].mxu0
    %250 = vmatprep.mubr.bf16.mxu0 0
    %251 = vmatmul.mubr.bf16.gmra.mrb[0].mxu0 %v126
    %v252 = vpop.f32.mrb[0].mxu0
    %v253 = vadd.f32 0.0, %v252
    %v254 = vpop.f32.mrb[0].mxu0
    %v255 = vpop.f32.mrb[0].mxu0
    %v256 = vadd.f32 0.0, %v255
    %v257 = vpop.f32.mrb[0].mxu0
    %258 = vmatprep.mubr.bf16.mxu0 0
    %259 = vmatmul.mubr.bf16.gmra.mrb[0].mxu0 %v127
    %v260 = vpop.f32.mrb[0].mxu0
    %v261 = vadd.f32 0.0, %v260
    %v262 = vpop.f32.mrb[0].mxu0
    %v263 = vpop.f32.mrb[0].mxu0
    %v264 = vadd.f32 0.0, %v263
    %v265 = vpop.f32.mrb[0].mxu0
    %266 = vmatprep.mubr.bf16.mxu0 0
    %267 = vmatmul.mubr.bf16.gmra.mrb[0].mxu0 %v128
    %v268 = vpop.f32.mrb[0].mxu0
    %v269 = vadd.f32 0.0, %v268
    %v270 = vpop.f32.mrb[0].mxu0
    %v271 = vpop.f32.mrb[0].mxu0
    %v272 = vadd.f32 0.0, %v271
    %v273 = vpop.f32.mrb[0].mxu0
    %274 = vmatprep.mubr.bf16.mxu0 0
    %275 = vmatmul.mubr.bf16.gmra.mrb[0].mxu0 %v129
    %v276 = vpop.f32.mrb[0].mxu0
    %v277 = vadd.f32 0.0, %v276
    %v278 = vpop.f32.mrb[0].mxu0
    %v279 = vpop.f32.mrb[0].mxu0
    %v280 = vadd.f32 0.0, %v279
    %v281 = vpop.f32.mrb[0].mxu0
    %282 = vdwg.mxu0
    %v283 = vlaneseq
    %v284 = vshrl.u32 %v283, 7
    %v285 = vsub.s32 0, %v284
    %v286 = vrot.slane %v88, %v285
    %287 = vmatprep.subr.mxu0 0.0
    %288 = vmatpush1.msra.mxu0 %v72
    %289 = vmatprep.subr.mxu0 0.0
    %290 = vmatpush1.msra.mxu0 %v73
    %291 = vmatprep.subr.mxu0 0.0
    %292 = vmatpush1.msra.mxu0 %v74
    %293 = vmatprep.subr.mxu0 0.0
    %294 = vmatpush1.msra.mxu0 %v75
    %295 = vmatprep.subr.mxu0 0.0
    %296 = vmatpush1.msra.mxu0 %v76
    %297 = vmatprep.subr.mxu0 0.0
    %298 = vmatpush1.msra.mxu0 %v77
    %299 = vmatprep.subr.mxu0 0.0
    %300 = vmatpush1.msra.mxu0 %v78
    %301 = vmatprep.subr.mxu0 0.0
    %302 = vmatpush1.msra.mxu0 %v79
    %303 = vmatprep.subr.mxu0 0.0
    %304 = vmatpush1.msra.mxu0 %v80
    %305 = vmatprep.subr.mxu0 0.0
    %306 = vmatpush1.msra.mxu0 %v81
    %307 = vmatprep.subr.mxu0 0.0
    %308 = vmatpush1.msra.mxu0 %v82
    %309 = vmatprep.subr.mxu0 0.0
    %310 = vmatpush1.msra.mxu0 %v83
    %311 = vmatprep.subr.mxu0 0.0
    %312 = vmatpush1.msra.mxu0 %v84
    %313 = vmatprep.subr.mxu0 0.0
    %314 = vmatpush1.msra.mxu0 %v85
    %315 = vmatprep.subr.mxu0 0.0
    %316 = vmatpush1.msra.mxu0 %v86
    %317 = vmatprep.subr.mxu0 0.0
    %318 = vmatpush1.msra.mxu0 %v87
    %319 = vmatprep.subr.mxu0 0.0
    %320 = vmatpush1.msra.mxu0 0.0
    %321 = vmatprep.subr.mxu0 0.0
    %322 = vmatpush1.msra.mxu0 0.0
    %323 = vmatprep.subr.mxu0 0.0
    %324 = vmatpush1.msra.mxu0 0.0
    %325 = vmatprep.subr.mxu0 0.0
    %326 = vmatpush1.msra.mxu0 0.0
    %327 = vmatprep.subr.mxu0 0.0
    %328 = vmatpush1.msra.mxu0 0.0
    %329 = vmatprep.subr.mxu0 0.0
    %330 = vmatpush1.msra.mxu0 0.0
    %331 = vmatprep.subr.mxu0 0.0
    %332 = vmatpush1.msra.mxu0 0.0
    %333 = vmatprep.subr.mxu0 0.0
    %334 = vmatpush1.msra.mxu0 0.0
    %335 = vmatprep.subr.mxu0 0.0
    %336 = vmatpush1.msra.mxu0 0.0
    %337 = vmatprep.subr.mxu0 0.0
    %338 = vmatpush1.msra.mxu0 0.0
    %339 = vmatprep.subr.mxu0 0.0
    %340 = vmatpush1.msra.mxu0 0.0
    %341 = vmatprep.subr.mxu0 0.0
    %342 = vmatpush1.msra.mxu0 0.0
    %343 = vmatprep.subr.mxu0 0.0
    %344 = vmatpush1.msra.mxu0 0.0
    %345 = vmatprep.subr.mxu0 0.0
    %346 = vmatpush1.msra.mxu0 0.0
    %347 = vmatprep.subr.mxu0 0.0
    %348 = vmatpush1.msra.mxu0 0.0
    %349 = vmatprep.subr.mxu0 0.0
    %350 = vmatpush1.msra.mxu0 0.0
    %351 = vmatprep.mubr.f32.mxu0 0.0
    %352 = vmatmul.mubr.f32.gmra.mrb[0].mxu0 %v221
    %v353 = vpop.f32.mrb[0].mxu0
    %v354 = vadd.f32 %v286, %v353
    %v355 = vpop.f32.mrb[0].mxu0
    %356 = vmatprep.mubr.f32.mxu0 0.0
    %357 = vmatmul.mubr.f32.gmra.mrb[0].mxu0 %v224
    %v358 = vpop.f32.mrb[0].mxu0
    %v359 = vadd.f32 %v286, %v358
    %v360 = vpop.f32.mrb[0].mxu0
    %361 = vmatprep.mubr.f32.mxu0 0.0
    %362 = vmatmul.mubr.f32.gmra.mrb[0].mxu0 %v229
    %v363 = vpop.f32.mrb[0].mxu0
    %v364 = vadd.f32 %v286, %v363
    %v365 = vpop.f32.mrb[0].mxu0
    %366 = vmatprep.mubr.f32.mxu0 0.0
    %367 = vmatmul.mubr.f32.gmra.mrb[0].mxu0 %v232
    %v368 = vpop.f32.mrb[0].mxu0
    %v369 = vadd.f32 %v286, %v368
    %v370 = vpop.f32.mrb[0].mxu0
    %371 = vmatprep.mubr.f32.mxu0 0.0
    %372 = vmatmul.mubr.f32.gmra.mrb[0].mxu0 %v237
    %v373 = vpop.f32.mrb[0].mxu0
    %v374 = vadd.f32 %v286, %v373
    %v375 = vpop.f32.mrb[0].mxu0
    %376 = vmatprep.mubr.f32.mxu0 0.0
    %377 = vmatmul.mubr.f32.gmra.mrb[0].mxu0 %v240
    %v378 = vpop.f32.mrb[0].mxu0
    %v379 = vadd.f32 %v286, %v378
    %v380 = vpop.f32.mrb[0].mxu0
    %381 = vmatprep.mubr.f32.mxu0 0.0
    %382 = vmatmul.mubr.f32.gmra.mrb[0].mxu0 %v245
    %v383 = vpop.f32.mrb[0].mxu0
    %v384 = vadd.f32 %v286, %v383
    %v385 = vpop.f32.mrb[0].mxu0
    %386 = vmatprep.mubr.f32.mxu0 0.0
    %387 = vmatmul.mubr.f32.gmra.mrb[0].mxu0 %v248
    %v388 = vpop.f32.mrb[0].mxu0
    %v389 = vadd.f32 %v286, %v388
    %v390 = vpop.f32.mrb[0].mxu0
    %391 = vmatprep.mubr.f32.mxu0 0.0
    %392 = vmatmul.mubr.f32.gmra.mrb[0].mxu0 %v253
    %v393 = vpop.f32.mrb[0].mxu0
    %v394 = vadd.f32 %v286, %v393
    %v395 = vpop.f32.mrb[0].mxu0
    %396 = vmatprep.mubr.f32.mxu0 0.0
    %397 = vmatmul.mubr.f32.gmra.mrb[0].mxu0 %v256
    %v398 = vpop.f32.mrb[0].mxu0
    %v399 = vadd.f32 %v286, %v398
    %v400 = vpop.f32.mrb[0].mxu0
    %401 = vmatprep.mubr.f32.mxu0 0.0
    %402 = vmatmul.mubr.f32.gmra.mrb[0].mxu0 %v261
    %v403 = vpop.f32.mrb[0].mxu0
    %v404 = vadd.f32 %v286, %v403
    %v405 = vpop.f32.mrb[0].mxu0
    %406 = vmatprep.mubr.f32.mxu0 0.0
    %407 = vmatmul.mubr.f32.gmra.mrb[0].mxu0 %v264
    %v408 = vpop.f32.mrb[0].mxu0
    %v409 = vadd.f32 %v286, %v408
    %v410 = vpop.f32.mrb[0].mxu0
    %411 = vmatprep.mubr.f32.mxu0 0.0
    %412 = vmatmul.mubr.f32.gmra.mrb[0].mxu0 %v269
    %v413 = vpop.f32.mrb[0].mxu0
    %v414 = vadd.f32 %v286, %v413
    %v415 = vpop.f32.mrb[0].mxu0
    %416 = vmatprep.mubr.f32.mxu0 0.0
    %417 = vmatmul.mubr.f32.gmra.mrb[0].mxu0 %v272
    %v418 = vpop.f32.mrb[0].mxu0
    %v419 = vadd.f32 %v286, %v418
    %v420 = vpop.f32.mrb[0].mxu0
    %421 = vmatprep.mubr.f32.mxu0 0.0
    %422 = vmatmul.mubr.f32.gmra.mrb[0].mxu0 %v277
    %v423 = vpop.f32.mrb[0].mxu0
    %v424 = vadd.f32 %v286, %v423
    %v425 = vpop.f32.mrb[0].mxu0
    %426 = vmatprep.mubr.f32.mxu0 0.0
    %427 = vmatmul.mubr.f32.gmra.mrb[0].mxu0 %v280
    %v428 = vpop.f32.mrb[0].mxu0
    %v429 = vadd.f32 %v286, %v428
    %v430 = vpop.f32.mrb[0].mxu0
    %431 = vdwg.mxu0
    %v432 = vmax.f32 %v354, 0.0
    %v433 = vmax.f32 %v359, 0.0
    %v434 = vmax.f32 %v364, 0.0
    %v435 = vmax.f32 %v369, 0.0
    %v436 = vmax.f32 %v374, 0.0
    %v437 = vmax.f32 %v379, 0.0
    %v438 = vmax.f32 %v384, 0.0
    %v439 = vmax.f32 %v389, 0.0
    %v440 = vmax.f32 %v394, 0.0
    %v441 = vmax.f32 %v399, 0.0
    %v442 = vmax.f32 %v404, 0.0
    %v443 = vmax.f32 %v409, 0.0
    %v444 = vmax.f32 %v414, 0.0
    %v445 = vmax.f32 %v419, 0.0
    %v446 = vmax.f32 %v424, 0.0
    %v447 = vmax.f32 %v429, 0.0
    %v448 = vld [vmem:[#allocation2] sm:$0xf]
    %v449 = vld [vmem:[#allocation2 + $0x4] sm:$0xf]
    %v450 = vld [vmem:[#allocation2 + $0x8] sm:$0xf]
    %v451 = vld [vmem:[#allocation2 + $0xc] sm:$0xf]
    %v452 = vld [vmem:[#allocation2 + $0x10] sm:$0xf]
    %v453 = vld [vmem:[#allocation2 + $0x14] sm:$0xf]
    %v454 = vunpack.c.l.bf16 %v448
    %v455 = vunpack.c.l.bf16 %v449
    %v456 = vunpack.c.l.bf16 %v450
    %v457 = vunpack.c.l.bf16 %v451
    %v458 = vunpack.c.l.bf16 %v452
    %v459 = vunpack.c.l.bf16 %v453
    %460 = vmatprep.subr.mxu0 0.0
    %461 = vmatpush1.msra.mxu0 %v432
    %462 = vmatprep.subr.mxu0 0.0
    %463 = vmatpush1.msra.mxu0 %v433
    %464 = vmatprep.subr.mxu0 0.0
    %465 = vmatpush1.msra.mxu0 %v434
    %466 = vmatprep.subr.mxu0 0.0
    %467 = vmatpush1.msra.mxu0 %v435
    %468 = vmatprep.subr.mxu0 0.0
    %469 = vmatpush1.msra.mxu0 %v436
    %470 = vmatprep.subr.mxu0 0.0
    %471 = vmatpush1.msra.mxu0 %v437
    %472 = vmatprep.subr.mxu0 0.0
    %473 = vmatpush1.msra.mxu0 %v438
    %474 = vmatprep.subr.mxu0 0.0
    %475 = vmatpush1.msra.mxu0 %v439
    %476 = vmatprep.subr.mxu0 0.0
    %477 = vmatpush1.msra.mxu0 %v440
    %478 = vmatprep.subr.mxu0 0.0
    %479 = vmatpush1.msra.mxu0 %v441
    %480 = vmatprep.subr.mxu0 0.0
    %481 = vmatpush1.msra.mxu0 %v442
    %482 = vmatprep.subr.mxu0 0.0
    %483 = vmatpush1.msra.mxu0 %v443
    %484 = vmatprep.subr.mxu0 0.0
    %485 = vmatpush1.msra.mxu0 %v444
    %486 = vmatprep.subr.mxu0 0.0
    %487 = vmatpush1.msra.mxu0 %v445
    %488 = vmatprep.subr.mxu0 0.0
    %489 = vmatpush1.msra.mxu0 %v446
    %490 = vmatprep.subr.mxu0 0.0
    %491 = vmatpush1.msra.mxu0 %v447
    %492 = vmatprep.subr.mxu0 0.0
    %493 = vmatpush1.msra.mxu0 0.0
    %494 = vmatprep.subr.mxu0 0.0
    %495 = vmatpush1.msra.mxu0 0.0
    %496 = vmatprep.subr.mxu0 0.0
    %497 = vmatpush1.msra.mxu0 0.0
    %498 = vmatprep.subr.mxu0 0.0
    %499 = vmatpush1.msra.mxu0 0.0
    %500 = vmatprep.subr.mxu0 0.0
    %501 = vmatpush1.msra.mxu0 0.0
    %502 = vmatprep.subr.mxu0 0.0
    %503 = vmatpush1.msra.mxu0 0.0
    %504 = vmatprep.subr.mxu0 0.0
    %505 = vmatpush1.msra.mxu0 0.0
    %506 = vmatprep.subr.mxu0 0.0
    %507 = vmatpush1.msra.mxu0 0.0
    %508 = vmatprep.subr.mxu0 0.0
    %509 = vmatpush1.msra.mxu0 0.0
    %510 = vmatprep.subr.mxu0 0.0
    %511 = vmatpush1.msra.mxu0 0.0
    %512 = vmatprep.subr.mxu0 0.0
    %513 = vmatpush1.msra.mxu0 0.0
    %514 = vmatprep.subr.mxu0 0.0
    %515 = vmatpush1.msra.mxu0 0.0
    %516 = vmatprep.subr.mxu0 0.0
    %517 = vmatpush1.msra.mxu0 0.0
    %518 = vmatprep.subr.mxu0 0.0
    %519 = vmatpush1.msra.mxu0 0.0
    %520 = vmatprep.subr.mxu0 0.0
    %521 = vmatpush1.msra.mxu0 0.0
    %522 = vmatprep.subr.mxu0 0.0
    %523 = vmatpush1.msra.mxu0 0.0
    %524 = vmatprep.mubr.f32.mxu0 0.0
    %525 = vmatmul.mubr.f32.gmra.mrb[0].mxu0 %v454
    %v526 = vpop.f32.mrb[0].mxu0
    %v527 = vadd.f32 0.0, %v526
    %v528 = vpop.f32.mrb[0].mxu0
    %529 = vmatprep.mubr.f32.mxu0 0.0
    %530 = vmatmul.mubr.f32.gmra.mrb[0].mxu0 %v455
    %v531 = vpop.f32.mrb[0].mxu0
    %v532 = vadd.f32 0.0, %v531
    %v533 = vpop.f32.mrb[0].mxu0
    %534 = vmatprep.mubr.f32.mxu0 0.0
    %535 = vmatmul.mubr.f32.gmra.mrb[0].mxu0 %v456
    %v536 = vpop.f32.mrb[0].mxu0
    %v537 = vadd.f32 0.0, %v536
    %v538 = vpop.f32.mrb[0].mxu0
    %539 = vmatprep.mubr.f32.mxu0 0.0
    %540 = vmatmul.mubr.f32.gmra.mrb[0].mxu0 %v457
    %v541 = vpop.f32.mrb[0].mxu0
    %v542 = vadd.f32 0.0, %v541
    %v543 = vpop.f32.mrb[0].mxu0
    %544 = vmatprep.mubr.f32.mxu0 0.0
    %545 = vmatmul.mubr.f32.gmra.mrb[0].mxu0 %v458
    %v546 = vpop.f32.mrb[0].mxu0
    %v547 = vadd.f32 0.0, %v546
    %v548 = vpop.f32.mrb[0].mxu0
    %549 = vmatprep.mubr.f32.mxu0 0.0
    %550 = vmatmul.mubr.f32.gmra.mrb[0].mxu0 %v459
    %v551 = vpop.f32.mrb[0].mxu0
    %v552 = vadd.f32 0.0, %v551
    %v553 = vpop.f32.mrb[0].mxu0
    %554 = vdwg.mxu0
    %v555 = vlaneseq
    %v556 = vshrl.u32 %v555, 7
    %v557 = vsub.s32 0, %v556
    %v558 = vrot.slane %v89, %v557
    %559 = vmatprep.subr.mxu0 0.0
    %560 = vmatpush1.msra.mxu0 %v72
    %561 = vmatprep.subr.mxu0 0.0
    %562 = vmatpush1.msra.mxu0 %v73
    %563 = vmatprep.subr.mxu0 0.0
    %564 = vmatpush1.msra.mxu0 %v74
    %565 = vmatprep.subr.mxu0 0.0
    %566 = vmatpush1.msra.mxu0 %v75
    %567 = vmatprep.subr.mxu0 0.0
    %568 = vmatpush1.msra.mxu0 %v76
    %569 = vmatprep.subr.mxu0 0.0
    %570 = vmatpush1.msra.mxu0 %v77
    %571 = vmatprep.subr.mxu0 0.0
    %572 = vmatpush1.msra.mxu0 %v78
    %573 = vmatprep.subr.mxu0 0.0
    %574 = vmatpush1.msra.mxu0 %v79
    %575 = vmatprep.subr.mxu0 0.0
    %576 = vmatpush1.msra.mxu0 %v80
    %577 = vmatprep.subr.mxu0 0.0
    %578 = vmatpush1.msra.mxu0 %v81
    %579 = vmatprep.subr.mxu0 0.0
    %580 = vmatpush1.msra.mxu0 %v82
    %581 = vmatprep.subr.mxu0 0.0
    %582 = vmatpush1.msra.mxu0 %v83
    %583 = vmatprep.subr.mxu0 0.0
    %584 = vmatpush1.msra.mxu0 %v84
    %585 = vmatprep.subr.mxu0 0.0
    %586 = vmatpush1.msra.mxu0 %v85
    %587 = vmatprep.subr.mxu0 0.0
    %588 = vmatpush1.msra.mxu0 %v86
    %589 = vmatprep.subr.mxu0 0.0
    %590 = vmatpush1.msra.mxu0 %v87
    %591 = vmatprep.subr.mxu0 0.0
    %592 = vmatpush1.msra.mxu0 0.0
    %593 = vmatprep.subr.mxu0 0.0
    %594 = vmatpush1.msra.mxu0 0.0
    %595 = vmatprep.subr.mxu0 0.0
    %596 = vmatpush1.msra.mxu0 0.0
    %597 = vmatprep.subr.mxu0 0.0
    %598 = vmatpush1.msra.mxu0 0.0
    %599 = vmatprep.subr.mxu0 0.0
    %600 = vmatpush1.msra.mxu0 0.0
    %601 = vmatprep.subr.mxu0 0.0
    %602 = vmatpush1.msra.mxu0 0.0
    %603 = vmatprep.subr.mxu0 0.0
    %604 = vmatpush1.msra.mxu0 0.0
    %605 = vmatprep.subr.mxu0 0.0
    %606 = vmatpush1.msra.mxu0 0.0
    %607 = vmatprep.subr.mxu0 0.0
    %608 = vmatpush1.msra.mxu0 0.0
    %609 = vmatprep.subr.mxu0 0.0
    %610 = vmatpush1.msra.mxu0 0.0
    %611 = vmatprep.subr.mxu0 0.0
    %612 = vmatpush1.msra.mxu0 0.0
    %613 = vmatprep.subr.mxu0 0.0
    %614 = vmatpush1.msra.mxu0 0.0
    %615 = vmatprep.subr.mxu0 0.0
    %616 = vmatpush1.msra.mxu0 0.0
    %617 = vmatprep.subr.mxu0 0.0
    %618 = vmatpush1.msra.mxu0 0.0
    %619 = vmatprep.subr.mxu0 0.0
    %620 = vmatpush1.msra.mxu0 0.0
    %621 = vmatprep.subr.mxu0 0.0
    %622 = vmatpush1.msra.mxu0 0.0
    %623 = vmatprep.mubr.f32.mxu0 0.0
    %624 = vmatmul.mubr.f32.gmra.mrb[0].mxu0 %v527
    %v625 = vpop.f32.mrb[0].mxu0
    %v626 = vadd.f32 %v558, %v625
    %v627 = vpop.f32.mrb[0].mxu0
    %628 = vmatprep.mubr.f32.mxu0 0.0
    %629 = vmatmul.mubr.f32.gmra.mrb[0].mxu0 %v532
    %v630 = vpop.f32.mrb[0].mxu0
    %v631 = vadd.f32 %v558, %v630
    %v632 = vpop.f32.mrb[0].mxu0
    %633 = vmatprep.mubr.f32.mxu0 0.0
    %634 = vmatmul.mubr.f32.gmra.mrb[0].mxu0 %v537
    %v635 = vpop.f32.mrb[0].mxu0
    %v636 = vadd.f32 %v558, %v635
    %v637 = vpop.f32.mrb[0].mxu0
    %638 = vmatprep.mubr.f32.mxu0 0.0
    %639 = vmatmul.mubr.f32.gmra.mrb[0].mxu0 %v542
    %v640 = vpop.f32.mrb[0].mxu0
    %v641 = vadd.f32 %v558, %v640
    %v642 = vpop.f32.mrb[0].mxu0
    %643 = vmatprep.mubr.f32.mxu0 0.0
    %644 = vmatmul.mubr.f32.gmra.mrb[0].mxu0 %v547
    %v645 = vpop.f32.mrb[0].mxu0
    %v646 = vadd.f32 %v558, %v645
    %v647 = vpop.f32.mrb[0].mxu0
    %648 = vmatprep.mubr.f32.mxu0 0.0
    %649 = vmatmul.mubr.f32.gmra.mrb[0].mxu0 %v552
    %v650 = vpop.f32.mrb[0].mxu0
    %v651 = vadd.f32 %v558, %v650
    %v652 = vpop.f32.mrb[0].mxu0
    %653 = vdwg.mxu0
    %654 = vst [vmem:[%s2] sm:$0xff] %v626
    %655 = vst [vmem:[%s2 + $0x8] sm:$0xff] %v631
    %656 = vst [vmem:[%s2 + $0x10] sm:$0xff] %v636
    %657 = vst [vmem:[%s2 + $0x18] sm:$0xff] %v641
    %658 = vst [vmem:[%s2 + $0x20] sm:$0xff] %v646
    %659 = vst [vmem:[%s2 + $0x28] sm:$0xff] %v651
    // Predicated region
    $region18: #{gcn_net_forward.1} parent=1 // pred_check
      _
    $region19: #{gcn_net_forward.1} parent=1 // pred_check_branch
      %661 = sbr.rel (0) target = $region21
    $region20: #{gcn_net_forward.1} parent=1 // pred_region
      _
    $region21: #{gcn_net_forward.1} parent=1 // pred_fallthru
      _
    // Predicated region
    $region22: #{gcn_net_forward.1} parent=1 // pred_check
      _
    $region23: #{gcn_net_forward.1} parent=1 // pred_check_branch
      %663 = sbr.rel (0) target = $region25
    $region24: #{gcn_net_forward.1} parent=1 // pred_region
      _
    $region25: #{gcn_net_forward.1} parent=1 // pred_fallthru
      _
    %664 = vsyncpa [#allocation3], 1
    %665 = vsyncpa [#allocation5], 1

</llo_original>
